<compile_context>
chip_gen: v5e
topology: v5e:2x2
jax: 0.10.0
libtpu: 0.0.40
codegen_flags: <defaults>
</compile_context>

<pallas_src>
import jax
import jax.numpy as jnp
from jax.experimental import pallas as pl
from jax.experimental.pallas import tpu as pltpu

LANE = 128  # lane width / MXU-friendly padding


def _round_up(x, m):
    return (x + m - 1) // m * m


def fused_gcn_kernel(a_hbm, x_hbm, w0_ref, w_ref, b_ref, o_ref,
                     a_vmem, x_vmem, h_ref, sem):
    """One grid step == one GCN layer.

    a_hbm  : (Np, Np)    bf16  normalized adjacency, left in HBM (pl.ANY)
    x_hbm  : (Np, Pin)   bf16  padded input features, left in HBM (pl.ANY)
    w0_ref : (Pin, Ph)   bf16  layer-0 weight (resident, constant index map)
    w_ref  : (1, Ph, Ph) bf16  weight of layer l (used for l >= 1)
    b_ref  : (1, 1, Ph)  f32   bias of layer l
    o_ref  : (Np, Ph)    bf16  final output (written on last step only)
    a_vmem : (Np, Np)    bf16  single-buffered VMEM copy of A_norm
    x_vmem : (Np, Pin)   bf16  single-buffered VMEM copy of X
    h_ref  : (Np, Ph)    bf16  activations carried across layers
    sem    : (2,)        DMA semaphores
    """
    l = pl.program_id(0)
    last = pl.num_programs(0) - 1

    def layer(xw_f32):
        # Neighborhood aggregation: A_norm @ (H W_l)  (MXU, f32 accumulation).
        agg = jnp.dot(a_vmem[...], xw_f32.astype(jnp.bfloat16),
                      preferred_element_type=jnp.float32)
        # Bias + ReLU (dropout is identity in eval mode).
        h = jnp.maximum(agg + b_ref[0], 0.0)
        h_bf16 = h.astype(jnp.bfloat16)
        h_ref[...] = h_bf16

        @pl.when(l == last)
        def _():
            o_ref[...] = h_bf16

    @pl.when(l == 0)
    def _():
        # One-time, overlapped HBM -> VMEM copies of A_norm and X (single-buffered).
        cp_a = pltpu.make_async_copy(a_hbm, a_vmem, sem.at[0])
        cp_x = pltpu.make_async_copy(x_hbm, x_vmem, sem.at[1])
        cp_a.start()
        cp_x.start()
        cp_a.wait()
        cp_x.wait()
        # Layer-0 feature transform: X @ W_0 (Pin-wide contraction, own padding).
        layer(jnp.dot(x_vmem[...], w0_ref[...],
                      preferred_element_type=jnp.float32))

    @pl.when(l > 0)
    def _():
        # Hidden-layer feature transform: H @ W_l (Ph-wide contraction).
        layer(jnp.dot(h_ref[...], w_ref[0],
                      preferred_element_type=jnp.float32))


def normalized_adjacency(edge_index, num_nodes):
    """Dense D^{-1/2} (A + I) D^{-1/2} from a [2, E] edge_index (f32)."""
    src = edge_index[0]
    dst = edge_index[1]
    a = jnp.zeros((num_nodes, num_nodes), jnp.float32)
    a = a.at[src, dst].set(1.0)
    a = a + jnp.eye(num_nodes, dtype=jnp.float32)   # self-loops
    # NOTE: collapses duplicate edges to weight 1 (PyG's sparse path would sum them);
    # the in-script reference uses the same builder so results are consistent.
    a = jnp.minimum(a, 1.0)
    deg = jnp.sum(a, axis=1)
    d_inv_sqrt = jnp.where(deg > 0, 1.0 / jnp.sqrt(deg), 0.0)
    return a * d_inv_sqrt[:, None] * d_inv_sqrt[None, :]


def _pad2(a, rows, cols):
    return jnp.zeros((rows, cols), a.dtype).at[:a.shape[0], :a.shape[1]].set(a)


def xavier_uniform(key, fan_in, fan_out):
    limit = jnp.sqrt(6.0 / (fan_in + fan_out)).astype(jnp.float32)
    return jax.random.uniform(
        key, (fan_in, fan_out), jnp.float32, minval=-limit, maxval=limit)


def init_gcn_params(key, dims):
    """dims = [feat_dim, hidden, ...]; xavier-uniform W, zero b (matches reset_parameters)."""
    params = []
    for i in range(len(dims) - 1):
        key, sub = jax.random.split(key)
        w = xavier_uniform(sub, dims[i], dims[i + 1])
        b = jnp.zeros((1, dims[i + 1]), jnp.float32)
        params.append((w, b))
    return params


def gcn_encode(x, edge_index, params):
    """GCN.forward / GCN.encode: all layers fused into one Pallas kernel."""
    n, feat_dim = x.shape
    dims = [feat_dim] + [w.shape[1] for (w, _) in params]
    num_layers = len(params)

    np_ = _round_up(n, LANE)                 # padded node count
    p_in = _round_up(feat_dim, LANE)         # padded input feature width (layer 0 only)
    p_h = _round_up(max(dims[1:]), LANE)     # padded hidden width (all other layers)

    a_norm = normalized_adjacency(edge_index, n)
    a_pad = _pad2(a_norm, np_, np_).astype(jnp.bfloat16)
    x_pad = _pad2(x, np_, p_in).astype(jnp.bfloat16)

    w0 = _pad2(params[0][0], p_in, p_h).astype(jnp.bfloat16)
    if num_layers > 1:
        w_rest = jnp.stack(
            [_pad2(w, p_h, p_h) for (w, _) in params[1:]]).astype(jnp.bfloat16)
    else:
        # Dummy operand, never read (the l > 0 branch does not execute).
        w_rest = jnp.zeros((1, p_h, p_h), jnp.bfloat16)
    b_stack = jnp.stack([_pad2(b, 1, p_h) for (_, b) in params]
                        ).reshape(num_layers, 1, p_h)          # [L, 1, Ph] f32

    # VMEM budget from actual buffer sizes (A/X/h single-buffered scratch; the
    # pipelined operands W0/W_l/b/out are double-buffered by the runtime).
    vmem_need = (np_ * np_ * 2            # a_vmem
                 + np_ * p_in * 2         # x_vmem
                 + np_ * p_h * 2          # h_ref
                 + 2 * np_ * p_h * 2      # output block
                 + 2 * p_in * p_h * 2     # W0
                 + 2 * p_h * p_h * 2      # W_l
                 + 2 * p_h * 4)           # bias
    vmem_limit = int(min(2 * vmem_need + (8 << 20), 128 * 1024 * 1024))

    flops = (2 * np_ * p_in * p_h
             + max(num_layers - 1, 0) * 2 * np_ * p_h * p_h
             + num_layers * 2 * np_ * np_ * p_h)
    bytes_accessed = (a_pad.size * 2 + x_pad.size * 2 + w0.size * 2
                      + w_rest.size * 2 + b_stack.size * 4 + np_ * p_h * 2)

    out = pl.pallas_call(
        fused_gcn_kernel,
        out_shape=jax.ShapeDtypeStruct((np_, p_h), jnp.bfloat16),
        grid=(num_layers,),
        in_specs=[
            pl.BlockSpec(memory_space=pl.ANY),                # A_norm (HBM, copied once)
            pl.BlockSpec(memory_space=pl.ANY),                # X      (HBM, copied once)
            pl.BlockSpec((p_in, p_h), lambda l: (0, 0)),      # W_0 (resident)
            pl.BlockSpec((1, p_h, p_h),
                         lambda l: (jnp.maximum(l - 1, 0), 0, 0)),  # W_l (l >= 1)
            pl.BlockSpec((1, 1, p_h), lambda l: (l, 0, 0)),   # b_l
        ],
        out_specs=pl.BlockSpec((np_, p_h), lambda l: (0, 0)),
        scratch_shapes=[
            pltpu.VMEM((np_, np_), jnp.bfloat16),             # a_vmem
            pltpu.VMEM((np_, p_in), jnp.bfloat16),            # x_vmem
            pltpu.VMEM((np_, p_h), jnp.bfloat16),             # h_ref
            pltpu.SemaphoreType.DMA((2,)),
        ],
        compiler_params=pltpu.CompilerParams(
            dimension_semantics=("arbitrary",),               # layers are sequential
            vmem_limit_bytes=vmem_limit,
        ),
        cost_estimate=pl.CostEstimate(
            flops=flops, transcendentals=0, bytes_accessed=bytes_accessed),
    )(a_pad, x_pad, w0, w_rest, b_stack)

    return out[:n, :dims[-1]].astype(jnp.float32)


def gcn_encode_reference(x, edge_index, params):
    """Pure-JAX f32 reference for validation."""
    a_norm = normalized_adjacency(edge_index, x.shape[0])
    h = x
    for (w, b) in params:
        h = jnp.maximum(a_norm @ (h @ w) + b, 0.0)
    return h


if __name__ == "__main__":
    key = jax.random.PRNGKey(0)

    # Small shapes implied by the module: args.num_layers=2, feat_dim=16, dim(hidden)=32.
    num_nodes = 64
    feat_dim = 16
    hidden = 32
    num_layers = 2
    num_edges = 128

    k_x, k_e1, k_e2, k_p = jax.random.split(key, 4)
    x = jax.random.normal(k_x, (num_nodes, feat_dim), jnp.float32)
    src = jax.random.randint(k_e1, (num_edges,), 0, num_nodes)
    dst = jax.random.randint(k_e2, (num_edges,), 0, num_nodes)
    edge_index = jnp.stack([src, dst], axis=0)  # [2, E], int32

    dims = [feat_dim] + [hidden] * num_layers
    params = init_gcn_params(k_p, dims)

    encode = jax.jit(gcn_encode)
    out = encode(x, edge_index, params)
    out = jax.block_until_ready(out)
    assert out.shape == (num_nodes, hidden), out.shape
    assert jnp.all(jnp.isfinite(out))

    # Loose tolerance: kernel uses bf16 inputs/activations with f32 MXU accumulation.
    ref = gcn_encode_reference(x, edge_index, params)
    assert jnp.allclose(out, ref, rtol=1e-1, atol=1e-1), float(jnp.max(jnp.abs(out - ref)))

    print("KERNEL_OK")
</pallas_src>

<mosaic_0001>
module attributes {stable_mosaic.version = 11 : i64} {
  func.func @fused_gcn_kernel(%arg0: i32, %arg1: memref<128x128xbf16, #tpu.memory_space<any>>, %arg2: memref<128x128xbf16, #tpu.memory_space<any>>, %arg3: memref<128x128xbf16, #tpu.memory_space<vmem>>, %arg4: memref<1x128x128xbf16, #tpu.memory_space<vmem>>, %arg5: memref<1x1x128xf32, #tpu.memory_space<vmem>>, %arg6: memref<128x128xbf16, #tpu.memory_space<vmem>>, %arg7: memref<128x128xbf16, #tpu.memory_space<vmem>>, %arg8: memref<128x128xbf16, #tpu.memory_space<vmem>>, %arg9: memref<128x128xbf16, #tpu.memory_space<vmem>>, %arg10: memref<2x!tpu.dma_semaphore, #tpu.memory_space<semaphore_mem>>) attributes {dimension_semantics = [#tpu.dimension_semantics<arbitrary>], iteration_bounds = array<i64: 2>, scalar_prefetch = 0 : i64, scratch_operands = 4 : i64, tpu.core_type = #tpu.core_type<tc>, window_params = [{}, {}, {pipeline_mode = #tpu.pipeline_mode<synchronous>, transform_indices = @transform_2, window_bounds = array<i64: 128, 128>}, {transform_indices = @transform_3, window_bounds = array<i64: 1, 128, 128>}, {transform_indices = @transform_4, window_bounds = array<i64: 1, 1, 128>}, {pipeline_mode = #tpu.pipeline_mode<synchronous>, transform_indices = @transform_5, window_bounds = array<i64: 128, 128>}]} {
    %c0_i32 = arith.constant 0 : i32
    %0 = arith.cmpi eq, %arg0, %c0_i32 : i32
    %1 = arith.extui %0 : i1 to i32
    %c0_i32_0 = arith.constant 0 : i32
    %2 = arith.cmpi ne, %1, %c0_i32_0 : i32
    scf.if %2 {
      %c0_i32_3 = arith.constant 0 : i32
      %6 = tpu.memref_slice %arg10[%c0_i32_3] : memref<2x!tpu.dma_semaphore, #tpu.memory_space<semaphore_mem>> -> memref<1x!tpu.dma_semaphore, #tpu.memory_space<semaphore_mem>>
      %7 = tpu.memref_squeeze %6 : memref<1x!tpu.dma_semaphore, #tpu.memory_space<semaphore_mem>> -> memref<!tpu.dma_semaphore, #tpu.memory_space<semaphore_mem>>
      tpu.enqueue_dma source(%arg1 : memref<128x128xbf16, #tpu.memory_space<any>>) target(%arg7 : memref<128x128xbf16, #tpu.memory_space<vmem>>) target_semaphore(%7 : memref<!tpu.dma_semaphore, #tpu.memory_space<semaphore_mem>>)
      %c1_i32 = arith.constant 1 : i32
      %8 = tpu.memref_slice %arg10[%c1_i32] : memref<2x!tpu.dma_semaphore, #tpu.memory_space<semaphore_mem>> -> memref<1x!tpu.dma_semaphore, #tpu.memory_space<semaphore_mem>>
      %9 = tpu.memref_squeeze %8 : memref<1x!tpu.dma_semaphore, #tpu.memory_space<semaphore_mem>> -> memref<!tpu.dma_semaphore, #tpu.memory_space<semaphore_mem>>
      tpu.enqueue_dma source(%arg2 : memref<128x128xbf16, #tpu.memory_space<any>>) target(%arg8 : memref<128x128xbf16, #tpu.memory_space<vmem>>) target_semaphore(%9 : memref<!tpu.dma_semaphore, #tpu.memory_space<semaphore_mem>>)
      %c0_i32_4 = arith.constant 0 : i32
      %10 = tpu.memref_slice %arg10[%c0_i32_4] : memref<2x!tpu.dma_semaphore, #tpu.memory_space<semaphore_mem>> -> memref<1x!tpu.dma_semaphore, #tpu.memory_space<semaphore_mem>>
      %11 = tpu.memref_squeeze %10 : memref<1x!tpu.dma_semaphore, #tpu.memory_space<semaphore_mem>> -> memref<!tpu.dma_semaphore, #tpu.memory_space<semaphore_mem>>
      tpu.wait_dma2 semaphore(%11 : memref<!tpu.dma_semaphore, #tpu.memory_space<semaphore_mem>>) src(%arg1 : memref<128x128xbf16, #tpu.memory_space<any>>) dst(%arg7 : memref<128x128xbf16, #tpu.memory_space<vmem>>)
      %c1_i32_5 = arith.constant 1 : i32
      %12 = tpu.memref_slice %arg10[%c1_i32_5] : memref<2x!tpu.dma_semaphore, #tpu.memory_space<semaphore_mem>> -> memref<1x!tpu.dma_semaphore, #tpu.memory_space<semaphore_mem>>
      %13 = tpu.memref_squeeze %12 : memref<1x!tpu.dma_semaphore, #tpu.memory_space<semaphore_mem>> -> memref<!tpu.dma_semaphore, #tpu.memory_space<semaphore_mem>>
      tpu.wait_dma2 semaphore(%13 : memref<!tpu.dma_semaphore, #tpu.memory_space<semaphore_mem>>) src(%arg2 : memref<128x128xbf16, #tpu.memory_space<any>>) dst(%arg8 : memref<128x128xbf16, #tpu.memory_space<vmem>>)
      %c0 = arith.constant 0 : index
      %c0_6 = arith.constant 0 : index
      %14 = vector.load %arg8[%c0, %c0_6] : memref<128x128xbf16, #tpu.memory_space<vmem>>, vector<128x128xbf16>
      %c0_7 = arith.constant 0 : index
      %c0_8 = arith.constant 0 : index
      %15 = vector.load %arg3[%c0_7, %c0_8] : memref<128x128xbf16, #tpu.memory_space<vmem>>, vector<128x128xbf16>
      %cst = arith.constant dense<0.000000e+00> : vector<128x128xf32>
      %16 = tpu.matmul %14, %15, %cst {dimension_numbers = #tpu.dot_dimension_numbers<[1], [0], [0], [1], [0, 0, 1, 1], [], []>} : vector<128x128xbf16>, vector<128x128xbf16>, vector<128x128xf32> -> vector<128x128xf32>
      %c0_9 = arith.constant 0 : index
      %c0_10 = arith.constant 0 : index
      %17 = vector.load %arg7[%c0_9, %c0_10] : memref<128x128xbf16, #tpu.memory_space<vmem>>, vector<128x128xbf16>
      %18 = arith.truncf %16 : vector<128x128xf32> to vector<128x128xbf16>
      %cst_11 = arith.constant dense<0.000000e+00> : vector<128x128xf32>
      %19 = tpu.matmul %17, %18, %cst_11 {dimension_numbers = #tpu.dot_dimension_numbers<[1], [0], [0], [1], [0, 0, 1, 1], [], []>} : vector<128x128xbf16>, vector<128x128xbf16>, vector<128x128xf32> -> vector<128x128xf32>
      %c0_12 = arith.constant 0 : index
      %c0_13 = arith.constant 0 : index
      %c0_14 = arith.constant 0 : index
      %20 = vector.load %arg5[%c0_12, %c0_13, %c0_14] : memref<1x1x128xf32, #tpu.memory_space<vmem>>, vector<1x1x128xf32>
      %21 = vector.shape_cast %20 : vector<1x1x128xf32> to vector<1x128xf32>
      %22 = vector.broadcast %21 : vector<1x128xf32> to vector<128x128xf32>
      %23 = arith.addf %19, %22 : vector<128x128xf32>
      %cst_15 = arith.constant 0.000000e+00 : f32
      %24 = vector.broadcast %cst_15 : f32 to vector<128x128xf32>
      %25 = arith.maximumf %23, %24 : vector<128x128xf32>
      %26 = arith.truncf %25 : vector<128x128xf32> to vector<128x128xbf16>
      %c0_16 = arith.constant 0 : index
      %c0_17 = arith.constant 0 : index
      %27 = vector.load %arg9[%c0_16, %c0_17] : memref<128x128xbf16, #tpu.memory_space<vmem>>, vector<128x128xbf16>
      tpu.vector_store %arg9[%c0_16, %c0_17], %26 {strides = array<i32>} : memref<128x128xbf16, #tpu.memory_space<vmem>>, vector<128x128xbf16>,
      %c1_i32_18 = arith.constant 1 : i32
      %28 = arith.cmpi eq, %arg0, %c1_i32_18 : i32
      %29 = arith.extui %28 : i1 to i32
      %c0_i32_19 = arith.constant 0 : i32
      %30 = arith.cmpi ne, %29, %c0_i32_19 : i32
      scf.if %30 {
        %c0_20 = arith.constant 0 : index
        %c0_21 = arith.constant 0 : index
        %31 = vector.load %arg6[%c0_20, %c0_21] : memref<128x128xbf16, #tpu.memory_space<vmem>>, vector<128x128xbf16>
        tpu.vector_store %arg6[%c0_20, %c0_21], %26 {strides = array<i32>} : memref<128x128xbf16, #tpu.memory_space<vmem>>, vector<128x128xbf16>,
      } else {
      }
    } else {
    }
    %c0_i32_1 = arith.constant 0 : i32
    %3 = arith.cmpi sgt, %arg0, %c0_i32_1 : i32
    %4 = arith.extui %3 : i1 to i32
    %c0_i32_2 = arith.constant 0 : i32
    %5 = arith.cmpi ne, %4, %c0_i32_2 : i32
    scf.if %5 {
      %c0 = arith.constant 0 : index
      %c0_3 = arith.constant 0 : index
      %6 = vector.load %arg9[%c0, %c0_3] : memref<128x128xbf16, #tpu.memory_space<vmem>>, vector<128x128xbf16>
      %c0_4 = arith.constant 0 : index
      %c0_5 = arith.constant 0 : index
      %c0_6 = arith.constant 0 : index
      %7 = vector.load %arg4[%c0_4, %c0_5, %c0_6] : memref<1x128x128xbf16, #tpu.memory_space<vmem>>, vector<1x128x128xbf16>
      %8 = vector.shape_cast %7 : vector<1x128x128xbf16> to vector<128x128xbf16>
      %cst = arith.constant dense<0.000000e+00> : vector<128x128xf32>
      %9 = tpu.matmul %6, %8, %cst {dimension_numbers = #tpu.dot_dimension_numbers<[1], [0], [0], [1], [0, 0, 1, 1], [], []>} : vector<128x128xbf16>, vector<128x128xbf16>, vector<128x128xf32> -> vector<128x128xf32>
      %c0_7 = arith.constant 0 : index
      %c0_8 = arith.constant 0 : index
      %10 = vector.load %arg7[%c0_7, %c0_8] : memref<128x128xbf16, #tpu.memory_space<vmem>>, vector<128x128xbf16>
      %11 = arith.truncf %9 : vector<128x128xf32> to vector<128x128xbf16>
      %cst_9 = arith.constant dense<0.000000e+00> : vector<128x128xf32>
      %12 = tpu.matmul %10, %11, %cst_9 {dimension_numbers = #tpu.dot_dimension_numbers<[1], [0], [0], [1], [0, 0, 1, 1], [], []>} : vector<128x128xbf16>, vector<128x128xbf16>, vector<128x128xf32> -> vector<128x128xf32>
      %c0_10 = arith.constant 0 : index
      %c0_11 = arith.constant 0 : index
      %c0_12 = arith.constant 0 : index
      %13 = vector.load %arg5[%c0_10, %c0_11, %c0_12] : memref<1x1x128xf32, #tpu.memory_space<vmem>>, vector<1x1x128xf32>
      %14 = vector.shape_cast %13 : vector<1x1x128xf32> to vector<1x128xf32>
      %15 = vector.broadcast %14 : vector<1x128xf32> to vector<128x128xf32>
      %16 = arith.addf %12, %15 : vector<128x128xf32>
      %cst_13 = arith.constant 0.000000e+00 : f32
      %17 = vector.broadcast %cst_13 : f32 to vector<128x128xf32>
      %18 = arith.maximumf %16, %17 : vector<128x128xf32>
      %19 = arith.truncf %18 : vector<128x128xf32> to vector<128x128xbf16>
      %c0_14 = arith.constant 0 : index
      %c0_15 = arith.constant 0 : index
      %20 = vector.load %arg9[%c0_14, %c0_15] : memref<128x128xbf16, #tpu.memory_space<vmem>>, vector<128x128xbf16>
      tpu.vector_store %arg9[%c0_14, %c0_15], %19 {strides = array<i32>} : memref<128x128xbf16, #tpu.memory_space<vmem>>, vector<128x128xbf16>,
      %c1_i32 = arith.constant 1 : i32
      %21 = arith.cmpi eq, %arg0, %c1_i32 : i32
      %22 = arith.extui %21 : i1 to i32
      %c0_i32_16 = arith.constant 0 : i32
      %23 = arith.cmpi ne, %22, %c0_i32_16 : i32
      scf.if %23 {
        %c0_17 = arith.constant 0 : index
        %c0_18 = arith.constant 0 : index
        %24 = vector.load %arg6[%c0_17, %c0_18] : memref<128x128xbf16, #tpu.memory_space<vmem>>, vector<128x128xbf16>
        tpu.vector_store %arg6[%c0_17, %c0_18], %19 {strides = array<i32>} : memref<128x128xbf16, #tpu.memory_space<vmem>>, vector<128x128xbf16>,
      } else {
      }
    } else {
    }
    return
  }
  func.func @transform_2(%arg0: i32) -> (i32, i32) {
    %c0_i32 = arith.constant 0 : i32
    %c0_i32_0 = arith.constant 0 : i32
    %c0_i32_1 = arith.constant 0 : i32
    return %c0_i32, %c0_i32_0 : i32, i32
  }
  func.func @transform_3(%arg0: i32) -> (i32, i32, i32) {
    %c1_i32 = arith.constant 1 : i32
    %0 = arith.subi %arg0, %c1_i32 : i32
    %c0_i32 = arith.constant 0 : i32
    %1 = arith.maxsi %0, %c0_i32 : i32
    %c0_i32_0 = arith.constant 0 : i32
    %c0_i32_1 = arith.constant 0 : i32
    %c0_i32_2 = arith.constant 0 : i32
    return %1, %c0_i32_0, %c0_i32_1 : i32, i32, i32
  }
  func.func @transform_4(%arg0: i32) -> (i32, i32, i32) {
    %c0_i32 = arith.constant 0 : i32
    %c0_i32_0 = arith.constant 0 : i32
    %c0_i32_1 = arith.constant 0 : i32
    return %arg0, %c0_i32, %c0_i32_0 : i32, i32, i32
  }
  func.func @transform_5(%arg0: i32) -> (i32, i32) {
    %c0_i32 = arith.constant 0 : i32
    %c0_i32_0 = arith.constant 0 : i32
    %c0_i32_1 = arith.constant 0 : i32
    return %c0_i32, %c0_i32_0 : i32, i32
  }
}

</mosaic_0001>

<llo_original>
// kernel: gcn_encode.1
$region0: #{gcn_encode.1}
  #allocation0 [shape = 'u32[]', space=smem, size = 0x4, offset = 0x4, fixed_abs, tag = 'smem constant byte address 0x4 - core index']
  #allocation1 [shape = 'u32[72,128]{1,0:T(1,128)}', space=vmem, size = 0x9000, scoped, tag = 'internal scratch']
  #allocation2 [shape = 'bf16[128,128]{1,0:T(8,128)(2,1)}', space=vmem, size = 0x8000, scoped, tag = 'scratch operand']
  #allocation3 [shape = 'bf16[128,128]{1,0:T(8,128)(2,1)}', space=vmem, size = 0x8000, scoped, tag = 'scratch operand']
  #allocation4 [shape = 'bf16[128,128]{1,0:T(8,128)(2,1)}', space=vmem, size = 0x8000, scoped, tag = 'scratch operand']
  #allocation5 [shape = 's32[2]{0}', space=sflag, size = 0x8, scoped, tag = 'scratch operand']
  #allocation6 [shape = 's32[]', space=sflag, size = 0x4, offset = 0, fixed_abs, tag = 'sflag constant byte address 0x0 - dummy sync flag']
  #allocation7 [shape = 's32[]', space=sflag, size = 0x4, offset = 0, fixed_abs, tag = 'sflag constant byte address 0x0 - dummy sync flag']
  %s0 = inlined_call_operand.vmem [shape: bf16[128,128], index: 0, kind: input, shape index: {}]
  %s1 = inlined_call_operand.vmem [shape: bf16[128,128], index: 1, kind: input, shape index: {}]
  %s2 = inlined_call_operand.vmem [shape: bf16[128,128], index: 2, kind: input, shape index: {}]
  %s3 = inlined_call_operand.vmem [shape: bf16[1,128,128], index: 3, kind: input, shape index: {}]
  %s4 = inlined_call_operand.vmem [shape: f32[2,1,128], index: 4, kind: input, shape index: {}]
  %s5 = inlined_call_operand.vmem [shape: bf16[128,128], index: 5, kind: output, shape index: {}]
  %s6 = sld [smem:[#allocation0]]
  $region99: #{gcn_encode.1} parent=0
    _
  %s8 = ssub.s32 1, %s6
  %s9 = scalar_select 0, %s8, %s6
  loop: start=0, step=1, limit=4
  $region2: #{gcn_encode.1} parent=0 // loop_pre_header
    _
  $region3: #{gcn_encode.1} parent=0 // loop_header
    %s11 = sphi 0, %s15
    %p12 = scmp.ge.s32.totalorder %s11, 4
    %s19 = sphi 0, %s19
    %s21 = sphi 0, %s19
    %s22 = sphi 0, %s21
    %s36 = sphi 0, %s22
    %s48 = sphi 0, %s50
    %s51 = sphi 0, %s48
    %s52 = sphi 0, %s51
    %s68 = sphi 0, %s52
    %s74 = sphi 0, %s76
    %s77 = sphi 0, %s74
    %s78 = sphi 0, %s77
    %s94 = sphi 0, %s78
    %s98 = sphi 0, %s98
    %s100 = sphi 0, %s98
    %s101 = sphi 0, %s100
    %s115 = sphi 0, %s101
  $region4: #{gcn_encode.1} parent=0 // loop_header_branch
    %14 = sbr.rel (%p12) target = $region8
  $region5: #{gcn_encode.1} parent=0 // loop_body
    %s16 = ssub.s32 %s11, 1
    %s17 = ssub.s32 %s11, 2
    %s18 = sadd.s32 %s11, 1
    %s20 = sadd.s32 %s19, 1
    %p23 = scmp.eq.s32.totalorder %s11, 1
    %p24 = scmp.ne.s32.totalorder %s19, %s21
    %p25 = scmp.eq.s32.totalorder %s11, 0
    %p26 = por %p24, %p25
    %p27 = scmp.ne.s32.totalorder %s19, %s21
    %p28 = scmp.eq.s32.totalorder %s16, 1
    %p29 = por %p27, %p28
    %p30 = scmp.ne.s32.totalorder %s21, %s22
    %p31 = scmp.eq.s32.totalorder %s16, 0
    %p32 = por %p30, %p31
    %p33 = scmp.ne.s32.totalorder %s21, %s22
    %p34 = scmp.eq.s32.totalorder %s17, 1
    %p35 = por %p33, %p34
    %p37 = scmp.ne.s32.totalorder %s22, %s36
    %p38 = scmp.eq.s32.totalorder %s17, 0
    %p39 = por %p37, %p38
    %s40 = ssub.s32 %s11, 1
    %p41 = scmp.gt.s32.totalorder %s40, 0
    %s42 = scalar_select %p41, %s40, 0
    %s43 = ssub.s32 %s18, 1
    %p44 = scmp.gt.s32.totalorder %s43, 0
    %s45 = scalar_select %p44, %s43, 0
    %s46 = ssub.s32 %s42, %s45
    %p47 = scmp.eq.s32.totalorder %s46, 0
    %s49 = sadd.s32 %s48, 1
    %s50 = scalar_select %p47, %s48, %s49
    %p53 = pneg %p47
    %p54 = scmp.eq.s32.totalorder %s11, 1
    %p55 = por %p53, %p54
    %p56 = scmp.ne.s32.totalorder %s48, %s51
    %p57 = scmp.eq.s32.totalorder %s11, 0
    %p58 = por %p56, %p57
    %p59 = scmp.ne.s32.totalorder %s48, %s51
    %p60 = scmp.eq.s32.totalorder %s16, 1
    %p61 = por %p59, %p60
    %p62 = scmp.ne.s32.totalorder %s51, %s52
    %p63 = scmp.eq.s32.totalorder %s16, 0
    %p64 = por %p62, %p63
    %p65 = scmp.ne.s32.totalorder %s51, %s52
    %p66 = scmp.eq.s32.totalorder %s17, 1
    %p67 = por %p65, %p66
    %p69 = scmp.ne.s32.totalorder %s52, %s68
    %p70 = scmp.eq.s32.totalorder %s17, 0
    %p71 = por %p69, %p70
    %s72 = ssub.s32 %s11, %s18
    %p73 = scmp.eq.s32.totalorder %s72, 0
    %s75 = sadd.s32 %s74, 1
    %s76 = scalar_select %p73, %s74, %s75
    %p79 = pneg %p73
    %p80 = scmp.eq.s32.totalorder %s11, 1
    %p81 = por %p79, %p80
    %p82 = scmp.ne.s32.totalorder %s74, %s77
    %p83 = scmp.eq.s32.totalorder %s11, 0
    %p84 = por %p82, %p83
    %p85 = scmp.ne.s32.totalorder %s74, %s77
    %p86 = scmp.eq.s32.totalorder %s16, 1
    %p87 = por %p85, %p86
    %p88 = scmp.ne.s32.totalorder %s77, %s78
    %p89 = scmp.eq.s32.totalorder %s16, 0
    %p90 = por %p88, %p89
    %p91 = scmp.ne.s32.totalorder %s77, %s78
    %p92 = scmp.eq.s32.totalorder %s17, 1
    %p93 = por %p91, %p92
    %p95 = scmp.ne.s32.totalorder %s78, %s94
    %p96 = scmp.eq.s32.totalorder %s17, 0
    %p97 = por %p95, %p96
    %s99 = sadd.s32 %s98, 1
    %p102 = scmp.eq.s32.totalorder %s11, 1
    %p103 = scmp.ne.s32.totalorder %s98, %s100
    %p104 = scmp.eq.s32.totalorder %s11, 0
    %p105 = por %p103, %p104
    %p106 = scmp.ne.s32.totalorder %s98, %s100
    %p107 = scmp.eq.s32.totalorder %s16, 1
    %p108 = por %p106, %p107
    %p109 = scmp.ne.s32.totalorder %s100, %s101
    %p110 = scmp.eq.s32.totalorder %s16, 0
    %p111 = por %p109, %p110
    %p112 = scmp.ne.s32.totalorder %s100, %s101
    %p113 = scmp.eq.s32.totalorder %s17, 1
    %p114 = por %p112, %p113
    %p116 = scmp.ne.s32.totalorder %s101, %s115
    %p117 = scmp.eq.s32.totalorder %s17, 0
    %p118 = por %p116, %p117
    %p119 = scmp.le.s32.totalorder 1, %s11
    %p120 = scmp.lt.s32.totalorder %s11, 3
    %p121 = pnand %p119, %p120
    %p122 = pneg %p121
    // Predicated region
    $region9: #{gcn_encode.1} parent=5 // pred_check
      _
    $region10: #{gcn_encode.1} parent=5 // pred_check_branch
      %124 = sbr.rel (%p121) target = $region12
    $region11: #{gcn_encode.1} parent=5 // pred_region
      %s125 = ssub.s32 %s11, 1
      // Predicated region
      $region13: #{gcn_encode.1} parent=11 // pred_check
        %p126 = pneg %p32
      $region14: #{gcn_encode.1} parent=11 // pred_check_branch
        %128 = sbr.rel (%p126) target = $region16
      $region15: #{gcn_encode.1} parent=11 // pred_region
        _
      $region16: #{gcn_encode.1} parent=11 // pred_fallthru
        _
    $region12: #{gcn_encode.1} parent=5 // pred_fallthru
      _
    %p129 = scmp.lt.s32.totalorder %s11, 2
    // Predicated region
    $region17: #{gcn_encode.1} parent=5 // pred_check
      %p130 = pneg %p129
    $region18: #{gcn_encode.1} parent=5 // pred_check_branch
      %132 = sbr.rel (%p130) target = $region20
    $region19: #{gcn_encode.1} parent=5 // pred_region
      // Predicated region
      $region21: #{gcn_encode.1} parent=19 // pred_check
        %p133 = pneg %p58
      $region22: #{gcn_encode.1} parent=19 // pred_check_branch
        %135 = sbr.rel (%p133) target = $region24
      $region23: #{gcn_encode.1} parent=19 // pred_region
        %s136 = ssub.s32 %s11, 1
        %p137 = scmp.gt.s32.totalorder %s136, 0
        %s138 = scalar_select %p137, %s136, 0
        %p139 = scmp.lt.s32.totalorder %s138, 0
        %s140 = scalar_select %p139, %s138, 0
        %s141 = smul.addr %s140, 16
        %s142 = smul.addr %s141, 4
        %s143 = scalar_lea.vmem %s3, %s142
        %s144 = ssub.s32 %s11, 1
        %p145 = scmp.gt.s32.totalorder %s144, 0
        %s146 = scalar_select %p145, %s144, 0
      $region24: #{gcn_encode.1} parent=19 // pred_fallthru
        _
      // Predicated region
      $region25: #{gcn_encode.1} parent=19 // pred_check
        %p147 = pneg %p84
      $region26: #{gcn_encode.1} parent=19 // pred_check_branch
        %149 = sbr.rel (%p147) target = $region28
      $region27: #{gcn_encode.1} parent=19 // pred_region
        %p150 = scmp.lt.s32.totalorder %s11, 1
        %s151 = scalar_select %p150, %s11, 1
        %s152 = scalar_lea.vmem %s4, %s151
      $region28: #{gcn_encode.1} parent=19 // pred_fallthru
        _
    $region20: #{gcn_encode.1} parent=5 // pred_fallthru
      _
    %p153 = scmp.le.s32.totalorder 1, %s11
    %p154 = scmp.lt.s32.totalorder %s11, 3
    %p155 = pnand %p153, %p154
    %p156 = pneg %p155
    // Predicated region
    $region29: #{gcn_encode.1} parent=5 // pred_check
      _
    $region30: #{gcn_encode.1} parent=5 // pred_check_branch
      %158 = sbr.rel (%p155) target = $region32
    $region31: #{gcn_encode.1} parent=5 // pred_region
      %s159 = ssub.s32 %s11, 1
      %p160 = pneg %p32
      %p161 = pneg %p29
      %s162 = ssub.s32 %s16, 1
      %p163 = scmp.gt.s32.totalorder %s162, 0
      %s164 = scalar_select %p163, %s162, 0
      %p165 = scmp.lt.s32.totalorder %s164, 0
      %s166 = scalar_select %p165, %s164, 0
      %s167 = smul.addr %s166, 16
      %s168 = smul.addr %s167, 4
      %s169 = scalar_lea.vmem %s3, %s168
      %p170 = pneg %p64
      %p171 = pneg %p61
      %p172 = scmp.lt.s32.totalorder %s16, 1
      %s173 = scalar_select %p172, %s16, 1
      %s174 = scalar_lea.vmem %s4, %s173
      %p175 = pneg %p90
      %p176 = pneg %p87
      %p177 = pneg %p111
      %p178 = pneg %p108
      %s179 = ssub.s32 %s16, 1
      %p180 = scmp.gt.s32.totalorder %s179, 0
      %s181 = scalar_select %p180, %s179, 0
      %p182 = scmp.lt.s32.totalorder %s181, 0
      %s183 = scalar_select %p182, %s181, 0
      %s184 = smul.addr %s183, 16
      %s185 = smul.addr %s184, 4
      %s186 = scalar_lea.vmem %s3, %s185
      %s187 = ssub.s32 %s16, 1
      %p188 = scmp.gt.s32.totalorder %s187, 0
      %s189 = scalar_select %p188, %s187, 0
      %p190 = scmp.lt.s32.totalorder %s16, 1
      %s191 = scalar_select %p190, %s16, 1
      %s192 = scalar_lea.vmem %s4, %s191
      %p193 = scmp.eq.s32.totalorder %s16, 0
      // Predicated region
      $region33: #{gcn_encode.1} parent=31 // pred_check
        %p194 = pneg %p193
      $region34: #{gcn_encode.1} parent=31 // pred_check_branch
        %196 = sbr.rel (%p194) target = $region36
      $region35: #{gcn_encode.1} parent=31 // pred_region
        // Predicated region
        $region37: #{gcn_encode.1} parent=35 // pred_check
          _
        $region38: #{gcn_encode.1} parent=35 // pred_check_branch
          %198 = sbr.rel (0) target = $region40
        $region39: #{gcn_encode.1} parent=35 // pred_region
          loop: start=0, step=1, limit=1
          $region41: #{gcn_encode.1} parent=39 // loop_pre_header
            _
          $region42: #{gcn_encode.1} parent=39 // loop_header
            %s200 = sphi 0, %s204
            %p201 = scmp.ge.s32.totalorder %s200, 1
            %s205 = sphi %s0, %s0
            %s206 = sphi [#allocation2], [#allocation2]
          $region43: #{gcn_encode.1} parent=39 // loop_header_branch
            %203 = sbr.rel (%p201) target = $region47
          $region44: #{gcn_encode.1} parent=39 // loop_body
            %v207 = vld [vmem:[%s205] sm:$0xff]
            %208 = vst [vmem:[%s206] sm:$0xff] %v207
            %v209 = vld [vmem:[%s205 + $0x8] sm:$0xff]
            %210 = vst [vmem:[%s206 + $0x8] sm:$0xff] %v209
            %v211 = vld [vmem:[%s205 + $0x10] sm:$0xff]
            %212 = vst [vmem:[%s206 + $0x10] sm:$0xff] %v211
            %v213 = vld [vmem:[%s205 + $0x18] sm:$0xff]
            %214 = vst [vmem:[%s206 + $0x18] sm:$0xff] %v213
            %v215 = vld [vmem:[%s205 + $0x20] sm:$0xff]
            %216 = vst [vmem:[%s206 + $0x20] sm:$0xff] %v215
            %v217 = vld [vmem:[%s205 + $0x28] sm:$0xff]
            %218 = vst [vmem:[%s206 + $0x28] sm:$0xff] %v217
            %v219 = vld [vmem:[%s205 + $0x30] sm:$0xff]
            %220 = vst [vmem:[%s206 + $0x30] sm:$0xff] %v219
            %v221 = vld [vmem:[%s205 + $0x38] sm:$0xff]
            %222 = vst [vmem:[%s206 + $0x38] sm:$0xff] %v221
          $region45: #{gcn_encode.1} parent=39 // loop_footer
            %s204 = sadd.s32 1, %s200
          $region46: #{gcn_encode.1} parent=39 // loop_footer_branch
            %199 = sbr.rel target = $region42
          $region47: #{gcn_encode.1} parent=39 // loop_exit
            _
        $region40: #{gcn_encode.1} parent=35 // pred_fallthru
          _
        // Predicated region
        $region48: #{gcn_encode.1} parent=35 // pred_check
          _
        $region49: #{gcn_encode.1} parent=35 // pred_check_branch
          %224 = sbr.rel target = $region51
        $region50: #{gcn_encode.1} parent=35 // pred_region
          _
        $region51: #{gcn_encode.1} parent=35 // pred_fallthru
          _
        // Predicated region
        $region52: #{gcn_encode.1} parent=35 // pred_check
          _
        $region53: #{gcn_encode.1} parent=35 // pred_check_branch
          %227 = sbr.rel (0) target = $region55
        $region54: #{gcn_encode.1} parent=35 // pred_region
          %228 = vsyncadd [#allocation5], 1024
        $region55: #{gcn_encode.1} parent=35 // pred_fallthru
          _
        %s229 = scalar_lea.sflag [#allocation5], 1
        // Predicated region
        $region56: #{gcn_encode.1} parent=35 // pred_check
          _
        $region57: #{gcn_encode.1} parent=35 // pred_check_branch
          %231 = sbr.rel (0) target = $region59
        $region58: #{gcn_encode.1} parent=35 // pred_region
          loop: start=0, step=1, limit=1
          $region60: #{gcn_encode.1} parent=58 // loop_pre_header
            _
          $region61: #{gcn_encode.1} parent=58 // loop_header
            %s233 = sphi 0, %s237
            %p234 = scmp.ge.s32.totalorder %s233, 1
            %s238 = sphi %s1, %s1
            %s239 = sphi [#allocation3], [#allocation3]
          $region62: #{gcn_encode.1} parent=58 // loop_header_branch
            %236 = sbr.rel (%p234) target = $region66
          $region63: #{gcn_encode.1} parent=58 // loop_body
            %v240 = vld [vmem:[%s238] sm:$0xff]
            %241 = vst [vmem:[%s239] sm:$0xff] %v240
            %v242 = vld [vmem:[%s238 + $0x8] sm:$0xff]
            %243 = vst [vmem:[%s239 + $0x8] sm:$0xff] %v242
            %v244 = vld [vmem:[%s238 + $0x10] sm:$0xff]
            %245 = vst [vmem:[%s239 + $0x10] sm:$0xff] %v244
            %v246 = vld [vmem:[%s238 + $0x18] sm:$0xff]
            %247 = vst [vmem:[%s239 + $0x18] sm:$0xff] %v246
            %v248 = vld [vmem:[%s238 + $0x20] sm:$0xff]
            %249 = vst [vmem:[%s239 + $0x20] sm:$0xff] %v248
            %v250 = vld [vmem:[%s238 + $0x28] sm:$0xff]
            %251 = vst [vmem:[%s239 + $0x28] sm:$0xff] %v250
            %v252 = vld [vmem:[%s238 + $0x30] sm:$0xff]
            %253 = vst [vmem:[%s239 + $0x30] sm:$0xff] %v252
            %v254 = vld [vmem:[%s238 + $0x38] sm:$0xff]
            %255 = vst [vmem:[%s239 + $0x38] sm:$0xff] %v254
          $region64: #{gcn_encode.1} parent=58 // loop_footer
            %s237 = sadd.s32 1, %s233
          $region65: #{gcn_encode.1} parent=58 // loop_footer_branch
            %232 = sbr.rel target = $region61
          $region66: #{gcn_encode.1} parent=58 // loop_exit
            _
        $region59: #{gcn_encode.1} parent=35 // pred_fallthru
          _
        // Predicated region
        $region67: #{gcn_encode.1} parent=35 // pred_check
          _
        $region68: #{gcn_encode.1} parent=35 // pred_check_branch
          %257 = sbr.rel target = $region70
        $region69: #{gcn_encode.1} parent=35 // pred_region
          _
        $region70: #{gcn_encode.1} parent=35 // pred_fallthru
          _
        // Predicated region
        $region71: #{gcn_encode.1} parent=35 // pred_check
          _
        $region72: #{gcn_encode.1} parent=35 // pred_check_branch
          %260 = sbr.rel (0) target = $region74
        $region73: #{gcn_encode.1} parent=35 // pred_region
          %261 = vsyncadd %s229, 1024
        $region74: #{gcn_encode.1} parent=35 // pred_fallthru
          _
        %s262 = smul.u32 4, 16
        %s263 = smul.u32 %s262, 1
        %s264 = sshll.u32 %s263, 4
        %265 = dma.done [#allocation5], %s264
        %s266 = sshll.u32 %s263, 4
        %267 = dma.done %s229, %s266
        %v268 = vld [vmem:[#allocation3] sm:$0xf]
        %v269 = vld [vmem:[#allocation3 + $0x4] sm:$0xf]
        %v270 = vld [vmem:[#allocation3 + $0x8] sm:$0xf]
        %v271 = vld [vmem:[#allocation3 + $0xc] sm:$0xf]
        %v272 = vld [vmem:[#allocation3 + $0x10] sm:$0xf]
        %v273 = vld [vmem:[#allocation3 + $0x14] sm:$0xf]
        %v274 = vld [vmem:[#allocation3 + $0x18] sm:$0xf]
        %v275 = vld [vmem:[#allocation3 + $0x1c] sm:$0xf]
        %v276 = vld [vmem:[#allocation3 + $0x20] sm:$0xf]
        %v277 = vld [vmem:[#allocation3 + $0x24] sm:$0xf]
        %v278 = vld [vmem:[#allocation3 + $0x28] sm:$0xf]
        %v279 = vld [vmem:[#allocation3 + $0x2c] sm:$0xf]
        %v280 = vld [vmem:[#allocation3 + $0x30] sm:$0xf]
        %v281 = vld [vmem:[#allocation3 + $0x34] sm:$0xf]
        %v282 = vld [vmem:[#allocation3 + $0x38] sm:$0xf]
        %v283 = vld [vmem:[#allocation3 + $0x3c] sm:$0xf]
        %v284 = vld [vmem:[%s2] sm:$0xf]
        %v285 = vld [vmem:[%s2 + $0x4] sm:$0xf]
        %v286 = vld [vmem:[%s2 + $0x8] sm:$0xf]
        %v287 = vld [vmem:[%s2 + $0xc] sm:$0xf]
        %v288 = vld [vmem:[%s2 + $0x10] sm:$0xf]
        %v289 = vld [vmem:[%s2 + $0x14] sm:$0xf]
        %v290 = vld [vmem:[%s2 + $0x18] sm:$0xf]
        %v291 = vld [vmem:[%s2 + $0x1c] sm:$0xf]
        %v292 = vld [vmem:[%s2 + $0x20] sm:$0xf]
        %v293 = vld [vmem:[%s2 + $0x24] sm:$0xf]
        %v294 = vld [vmem:[%s2 + $0x28] sm:$0xf]
        %v295 = vld [vmem:[%s2 + $0x2c] sm:$0xf]
        %v296 = vld [vmem:[%s2 + $0x30] sm:$0xf]
        %v297 = vld [vmem:[%s2 + $0x34] sm:$0xf]
        %v298 = vld [vmem:[%s2 + $0x38] sm:$0xf]
        %v299 = vld [vmem:[%s2 + $0x3c] sm:$0xf]
        %v316 = vunpack.c.l.b16 %v268
        %v317 = vunpack.c.l.b16 %v269
        %v318 = vunpack.c.l.b16 %v270
        %v319 = vunpack.c.l.b16 %v271
        %v320 = vunpack.c.l.b16 %v272
        %v321 = vunpack.c.l.b16 %v273
        %v322 = vunpack.c.l.b16 %v274
        %v323 = vunpack.c.l.b16 %v275
        %v324 = vunpack.c.l.b16 %v276
        %v325 = vunpack.c.l.b16 %v277
        %v326 = vunpack.c.l.b16 %v278
        %v327 = vunpack.c.l.b16 %v279
        %v328 = vunpack.c.l.b16 %v280
        %v329 = vunpack.c.l.b16 %v281
        %v330 = vunpack.c.l.b16 %v282
        %v331 = vunpack.c.l.b16 %v283
        %v332 = vpack.c.b16 %v317, %v316
        %v333 = vpack.c.b16 %v319, %v318
        %v334 = vpack.c.b16 %v321, %v320
        %v335 = vpack.c.b16 %v323, %v322
        %v336 = vpack.c.b16 %v325, %v324
        %v337 = vpack.c.b16 %v327, %v326
        %v338 = vpack.c.b16 %v329, %v328
        %v339 = vpack.c.b16 %v331, %v330
        %v364 = vunpack.c.l.b16 %v284
        %v365 = vunpack.c.l.b16 %v285
        %v366 = vunpack.c.l.b16 %v286
        %v367 = vunpack.c.l.b16 %v287
        %v368 = vunpack.c.l.b16 %v288
        %v369 = vunpack.c.l.b16 %v289
        %v370 = vunpack.c.l.b16 %v290
        %v371 = vunpack.c.l.b16 %v291
        %v372 = vunpack.c.l.b16 %v292
        %v373 = vunpack.c.l.b16 %v293
        %v374 = vunpack.c.l.b16 %v294
        %v375 = vunpack.c.l.b16 %v295
        %v376 = vunpack.c.l.b16 %v296
        %v377 = vunpack.c.l.b16 %v297
        %v378 = vunpack.c.l.b16 %v298
        %v379 = vunpack.c.l.b16 %v299
        %v380 = vpack.c.b16 %v365, %v364
        %v381 = vpack.c.b16 %v367, %v366
        %v382 = vpack.c.b16 %v369, %v368
        %v383 = vpack.c.b16 %v371, %v370
        %v384 = vpack.c.b16 %v373, %v372
        %v385 = vpack.c.b16 %v375, %v374
        %v386 = vpack.c.b16 %v377, %v376
        %v387 = vpack.c.b16 %v379, %v378
        %396 = vmatpush.bf16.msra.mxu0 %v387
        %397 = vmatpush.bf16.msra.mxu0 %v386
        %398 = vmatpush.bf16.msra.mxu0 %v385
        %399 = vmatpush.bf16.msra.mxu0 %v384
        %400 = vmatpush.bf16.msra.mxu0 %v383
        %401 = vmatpush.bf16.msra.mxu0 %v382
        %402 = vmatpush.bf16.msra.mxu0 %v381
        %403 = vmatpush.bf16.msra.mxu0 %v380
        %404 = vmatmul.bf16.gmra.mxu0 %v332
        %v405 = vpop.f32.mrf.mxu0
        %v406 = vadd.f32 0.0, %v405
        %v407 = vpop.f32.mrf.mxu0
        %v408 = vadd.f32 0.0, %v407
        %409 = vmatmul.bf16.gmra.mxu0 %v333
        %v410 = vpop.f32.mrf.mxu0
        %v411 = vadd.f32 0.0, %v410
        %v412 = vpop.f32.mrf.mxu0
        %v413 = vadd.f32 0.0, %v412
        %414 = vmatmul.bf16.gmra.mxu0 %v334
        %v415 = vpop.f32.mrf.mxu0
        %v416 = vadd.f32 0.0, %v415
        %v417 = vpop.f32.mrf.mxu0
        %v418 = vadd.f32 0.0, %v417
        %419 = vmatmul.bf16.gmra.mxu0 %v335
        %v420 = vpop.f32.mrf.mxu0
        %v421 = vadd.f32 0.0, %v420
        %v422 = vpop.f32.mrf.mxu0
        %v423 = vadd.f32 0.0, %v422
        %424 = vmatmul.bf16.gmra.mxu0 %v336
        %v425 = vpop.f32.mrf.mxu0
        %v426 = vadd.f32 0.0, %v425
        %v427 = vpop.f32.mrf.mxu0
        %v428 = vadd.f32 0.0, %v427
        %429 = vmatmul.bf16.gmra.mxu0 %v337
        %v430 = vpop.f32.mrf.mxu0
        %v431 = vadd.f32 0.0, %v430
        %v432 = vpop.f32.mrf.mxu0
        %v433 = vadd.f32 0.0, %v432
        %434 = vmatmul.bf16.gmra.mxu0 %v338
        %v435 = vpop.f32.mrf.mxu0
        %v436 = vadd.f32 0.0, %v435
        %v437 = vpop.f32.mrf.mxu0
        %v438 = vadd.f32 0.0, %v437
        %439 = vmatmul.bf16.gmra.mxu0 %v339
        %v440 = vpop.f32.mrf.mxu0
        %v441 = vadd.f32 0.0, %v440
        %v442 = vpop.f32.mrf.mxu0
        %v443 = vadd.f32 0.0, %v442
        %444 = vdwg.mxu0
        %v445 = vld [vmem:[#allocation2] sm:$0xf]
        %v446 = vld [vmem:[#allocation2 + $0x4] sm:$0xf]
        %v447 = vld [vmem:[#allocation2 + $0x8] sm:$0xf]
        %v448 = vld [vmem:[#allocation2 + $0xc] sm:$0xf]
        %v449 = vld [vmem:[#allocation2 + $0x10] sm:$0xf]
        %v450 = vld [vmem:[#allocation2 + $0x14] sm:$0xf]
        %v451 = vld [vmem:[#allocation2 + $0x18] sm:$0xf]
        %v452 = vld [vmem:[#allocation2 + $0x1c] sm:$0xf]
        %v453 = vld [vmem:[#allocation2 + $0x20] sm:$0xf]
        %v454 = vld [vmem:[#allocation2 + $0x24] sm:$0xf]
        %v455 = vld [vmem:[#allocation2 + $0x28] sm:$0xf]
        %v456 = vld [vmem:[#allocation2 + $0x2c] sm:$0xf]
        %v457 = vld [vmem:[#allocation2 + $0x30] sm:$0xf]
        %v458 = vld [vmem:[#allocation2 + $0x34] sm:$0xf]
        %v459 = vld [vmem:[#allocation2 + $0x38] sm:$0xf]
        %v460 = vld [vmem:[#allocation2 + $0x3c] sm:$0xf]
        %v461 = vpack.c.bf16 %v408, %v406
        %v462 = vpack.c.bf16 %v413, %v411
        %v463 = vpack.c.bf16 %v418, %v416
        %v464 = vpack.c.bf16 %v423, %v421
        %v465 = vpack.c.bf16 %v428, %v426
        %v466 = vpack.c.bf16 %v433, %v431
        %v467 = vpack.c.bf16 %v438, %v436
        %v468 = vpack.c.bf16 %v443, %v441
        %v469 = vld [vmem:[%s192] sm:$0x1]
        %v471 = vperm.slane %v469, 0
        %v489 = vunpack.c.l.b16 %v445
        %v490 = vunpack.c.l.b16 %v446
        %v491 = vunpack.c.l.b16 %v447
        %v492 = vunpack.c.l.b16 %v448
        %v493 = vunpack.c.l.b16 %v449
        %v494 = vunpack.c.l.b16 %v450
        %v495 = vunpack.c.l.b16 %v451
        %v496 = vunpack.c.l.b16 %v452
        %v497 = vunpack.c.l.b16 %v453
        %v498 = vunpack.c.l.b16 %v454
        %v499 = vunpack.c.l.b16 %v455
        %v500 = vunpack.c.l.b16 %v456
        %v501 = vunpack.c.l.b16 %v457
        %v502 = vunpack.c.l.b16 %v458
        %v503 = vunpack.c.l.b16 %v459
        %v504 = vunpack.c.l.b16 %v460
        %v505 = vpack.c.b16 %v490, %v489
        %v506 = vpack.c.b16 %v492, %v491
        %v507 = vpack.c.b16 %v494, %v493
        %v508 = vpack.c.b16 %v496, %v495
        %v509 = vpack.c.b16 %v498, %v497
        %v510 = vpack.c.b16 %v500, %v499
        %v511 = vpack.c.b16 %v502, %v501
        %v512 = vpack.c.b16 %v504, %v503
        %521 = vmatpush.bf16.msra.mxu0 %v468
        %522 = vmatpush.bf16.msra.mxu0 %v467
        %523 = vmatpush.bf16.msra.mxu0 %v466
        %524 = vmatpush.bf16.msra.mxu0 %v465
        %525 = vmatpush.bf16.msra.mxu0 %v464
        %526 = vmatpush.bf16.msra.mxu0 %v463
        %527 = vmatpush.bf16.msra.mxu0 %v462
        %528 = vmatpush.bf16.msra.mxu0 %v461
        %529 = vmatmul.bf16.gmra.mxu0 %v505
        %v530 = vpop.f32.mrf.mxu0
        %v531 = vadd.f32 %v471, %v530
        %v532 = vpop.f32.mrf.mxu0
        %v533 = vadd.f32 %v471, %v532
        %534 = vmatmul.bf16.gmra.mxu0 %v506
        %v535 = vpop.f32.mrf.mxu0
        %v536 = vadd.f32 %v471, %v535
        %v537 = vpop.f32.mrf.mxu0
        %v538 = vadd.f32 %v471, %v537
        %539 = vmatmul.bf16.gmra.mxu0 %v507
        %v540 = vpop.f32.mrf.mxu0
        %v541 = vadd.f32 %v471, %v540
        %v542 = vpop.f32.mrf.mxu0
        %v543 = vadd.f32 %v471, %v542
        %544 = vmatmul.bf16.gmra.mxu0 %v508
        %v545 = vpop.f32.mrf.mxu0
        %v546 = vadd.f32 %v471, %v545
        %v547 = vpop.f32.mrf.mxu0
        %v548 = vadd.f32 %v471, %v547
        %549 = vmatmul.bf16.gmra.mxu0 %v509
        %v550 = vpop.f32.mrf.mxu0
        %v551 = vadd.f32 %v471, %v550
        %v552 = vpop.f32.mrf.mxu0
        %v553 = vadd.f32 %v471, %v552
        %554 = vmatmul.bf16.gmra.mxu0 %v510
        %v555 = vpop.f32.mrf.mxu0
        %v556 = vadd.f32 %v471, %v555
        %v557 = vpop.f32.mrf.mxu0
        %v558 = vadd.f32 %v471, %v557
        %559 = vmatmul.bf16.gmra.mxu0 %v511
        %v560 = vpop.f32.mrf.mxu0
        %v561 = vadd.f32 %v471, %v560
        %v562 = vpop.f32.mrf.mxu0
        %v563 = vadd.f32 %v471, %v562
        %564 = vmatmul.bf16.gmra.mxu0 %v512
        %v565 = vpop.f32.mrf.mxu0
        %v566 = vadd.f32 %v471, %v565
        %v567 = vpop.f32.mrf.mxu0
        %v568 = vadd.f32 %v471, %v567
        %569 = vdwg.mxu0
        %v570 = vmax.f32 %v531, 0.0
        %v571 = vmax.f32 %v533, 0.0
        %v572 = vmax.f32 %v536, 0.0
        %v573 = vmax.f32 %v538, 0.0
        %v574 = vmax.f32 %v541, 0.0
        %v575 = vmax.f32 %v543, 0.0
        %v576 = vmax.f32 %v546, 0.0
        %v577 = vmax.f32 %v548, 0.0
        %v578 = vmax.f32 %v551, 0.0
        %v579 = vmax.f32 %v553, 0.0
        %v580 = vmax.f32 %v556, 0.0
        %v581 = vmax.f32 %v558, 0.0
        %v582 = vmax.f32 %v561, 0.0
        %v583 = vmax.f32 %v563, 0.0
        %v584 = vmax.f32 %v566, 0.0
        %v585 = vmax.f32 %v568, 0.0
        %v586 = vpack.c.bf16 %v570, %v570
        %v587 = vpack.c.bf16 %v571, %v571
        %v588 = vpack.c.bf16 %v572, %v572
        %v589 = vpack.c.bf16 %v573, %v573
        %v590 = vpack.c.bf16 %v574, %v574
        %v591 = vpack.c.bf16 %v575, %v575
        %v592 = vpack.c.bf16 %v576, %v576
        %v593 = vpack.c.bf16 %v577, %v577
        %v594 = vpack.c.bf16 %v578, %v578
        %v595 = vpack.c.bf16 %v579, %v579
        %v596 = vpack.c.bf16 %v580, %v580
        %v597 = vpack.c.bf16 %v581, %v581
        %v598 = vpack.c.bf16 %v582, %v582
        %v599 = vpack.c.bf16 %v583, %v583
        %v600 = vpack.c.bf16 %v584, %v584
        %v601 = vpack.c.bf16 %v585, %v585
        %602 = vst [vmem:[#allocation4] sm:$0xf] %v586
        %603 = vst [vmem:[#allocation4 + $0x4] sm:$0xf] %v587
        %604 = vst [vmem:[#allocation4 + $0x8] sm:$0xf] %v588
        %605 = vst [vmem:[#allocation4 + $0xc] sm:$0xf] %v589
        %606 = vst [vmem:[#allocation4 + $0x10] sm:$0xf] %v590
        %607 = vst [vmem:[#allocation4 + $0x14] sm:$0xf] %v591
        %608 = vst [vmem:[#allocation4 + $0x18] sm:$0xf] %v592
        %609 = vst [vmem:[#allocation4 + $0x1c] sm:$0xf] %v593
        %610 = vst [vmem:[#allocation4 + $0x20] sm:$0xf] %v594
        %611 = vst [vmem:[#allocation4 + $0x24] sm:$0xf] %v595
        %612 = vst [vmem:[#allocation4 + $0x28] sm:$0xf] %v596
        %613 = vst [vmem:[#allocation4 + $0x2c] sm:$0xf] %v597
        %614 = vst [vmem:[#allocation4 + $0x30] sm:$0xf] %v598
        %615 = vst [vmem:[#allocation4 + $0x34] sm:$0xf] %v599
        %616 = vst [vmem:[#allocation4 + $0x38] sm:$0xf] %v600
        %617 = vst [vmem:[#allocation4 + $0x3c] sm:$0xf] %v601
        %p618 = scmp.eq.s32.totalorder %s16, 1
        // Predicated region
        $region75: #{gcn_encode.1} parent=35 // pred_check
          %p619 = pneg %p618
        $region76: #{gcn_encode.1} parent=35 // pred_check_branch
          %621 = sbr.rel (%p619) target = $region78
        $region77: #{gcn_encode.1} parent=35 // pred_region
          %622 = vst [vmem:[%s5] sm:$0xf] %v586
          %623 = vst [vmem:[%s5 + $0x4] sm:$0xf] %v587
          %624 = vst [vmem:[%s5 + $0x8] sm:$0xf] %v588
          %625 = vst [vmem:[%s5 + $0xc] sm:$0xf] %v589
          %626 = vst [vmem:[%s5 + $0x10] sm:$0xf] %v590
          %627 = vst [vmem:[%s5 + $0x14] sm:$0xf] %v591
          %628 = vst [vmem:[%s5 + $0x18] sm:$0xf] %v592
          %629 = vst [vmem:[%s5 + $0x1c] sm:$0xf] %v593
          %630 = vst [vmem:[%s5 + $0x20] sm:$0xf] %v594
          %631 = vst [vmem:[%s5 + $0x24] sm:$0xf] %v595
          %632 = vst [vmem:[%s5 + $0x28] sm:$0xf] %v596
          %633 = vst [vmem:[%s5 + $0x2c] sm:$0xf] %v597
          %634 = vst [vmem:[%s5 + $0x30] sm:$0xf] %v598
          %635 = vst [vmem:[%s5 + $0x34] sm:$0xf] %v599
          %636 = vst [vmem:[%s5 + $0x38] sm:$0xf] %v600
          %637 = vst [vmem:[%s5 + $0x3c] sm:$0xf] %v601
        $region78: #{gcn_encode.1} parent=35 // pred_fallthru
          _
      $region36: #{gcn_encode.1} parent=31 // pred_fallthru
        _
      %p638 = scmp.gt.s32.totalorder %s16, 0
      // Predicated region
      $region79: #{gcn_encode.1} parent=31 // pred_check
        %p639 = pneg %p638
      $region80: #{gcn_encode.1} parent=31 // pred_check_branch
        %641 = sbr.rel (%p639) target = $region82
      $region81: #{gcn_encode.1} parent=31 // pred_region
        %v642 = vld [vmem:[#allocation4] sm:$0xf]
        %v643 = vld [vmem:[#allocation4 + $0x4] sm:$0xf]
        %v644 = vld [vmem:[#allocation4 + $0x8] sm:$0xf]
        %v645 = vld [vmem:[#allocation4 + $0xc] sm:$0xf]
        %v646 = vld [vmem:[#allocation4 + $0x10] sm:$0xf]
        %v647 = vld [vmem:[#allocation4 + $0x14] sm:$0xf]
        %v648 = vld [vmem:[#allocation4 + $0x18] sm:$0xf]
        %v649 = vld [vmem:[#allocation4 + $0x1c] sm:$0xf]
        %v650 = vld [vmem:[#allocation4 + $0x20] sm:$0xf]
        %v651 = vld [vmem:[#allocation4 + $0x24] sm:$0xf]
        %v652 = vld [vmem:[#allocation4 + $0x28] sm:$0xf]
        %v653 = vld [vmem:[#allocation4 + $0x2c] sm:$0xf]
        %v654 = vld [vmem:[#allocation4 + $0x30] sm:$0xf]
        %v655 = vld [vmem:[#allocation4 + $0x34] sm:$0xf]
        %v656 = vld [vmem:[#allocation4 + $0x38] sm:$0xf]
        %v657 = vld [vmem:[#allocation4 + $0x3c] sm:$0xf]
        %v658 = vld [vmem:[%s186] sm:$0xf]
        %v659 = vld [vmem:[%s186 + $0x4] sm:$0xf]
        %v660 = vld [vmem:[%s186 + $0x8] sm:$0xf]
        %v661 = vld [vmem:[%s186 + $0xc] sm:$0xf]
        %v662 = vld [vmem:[%s186 + $0x10] sm:$0xf]
        %v663 = vld [vmem:[%s186 + $0x14] sm:$0xf]
        %v664 = vld [vmem:[%s186 + $0x18] sm:$0xf]
        %v665 = vld [vmem:[%s186 + $0x1c] sm:$0xf]
        %v666 = vld [vmem:[%s186 + $0x20] sm:$0xf]
        %v667 = vld [vmem:[%s186 + $0x24] sm:$0xf]
        %v668 = vld [vmem:[%s186 + $0x28] sm:$0xf]
        %v669 = vld [vmem:[%s186 + $0x2c] sm:$0xf]
        %v670 = vld [vmem:[%s186 + $0x30] sm:$0xf]
        %v671 = vld [vmem:[%s186 + $0x34] sm:$0xf]
        %v672 = vld [vmem:[%s186 + $0x38] sm:$0xf]
        %v673 = vld [vmem:[%s186 + $0x3c] sm:$0xf]
        %v690 = vunpack.c.l.b16 %v642
        %v691 = vunpack.c.l.b16 %v643
        %v692 = vunpack.c.l.b16 %v644
        %v693 = vunpack.c.l.b16 %v645
        %v694 = vunpack.c.l.b16 %v646
        %v695 = vunpack.c.l.b16 %v647
        %v696 = vunpack.c.l.b16 %v648
        %v697 = vunpack.c.l.b16 %v649
        %v698 = vunpack.c.l.b16 %v650
        %v699 = vunpack.c.l.b16 %v651
        %v700 = vunpack.c.l.b16 %v652
        %v701 = vunpack.c.l.b16 %v653
        %v702 = vunpack.c.l.b16 %v654
        %v703 = vunpack.c.l.b16 %v655
        %v704 = vunpack.c.l.b16 %v656
        %v705 = vunpack.c.l.b16 %v657
        %v706 = vpack.c.b16 %v691, %v690
        %v707 = vpack.c.b16 %v693, %v692
        %v708 = vpack.c.b16 %v695, %v694
        %v709 = vpack.c.b16 %v697, %v696
        %v710 = vpack.c.b16 %v699, %v698
        %v711 = vpack.c.b16 %v701, %v700
        %v712 = vpack.c.b16 %v703, %v702
        %v713 = vpack.c.b16 %v705, %v704
        %v738 = vunpack.c.l.b16 %v658
        %v739 = vunpack.c.l.b16 %v659
        %v740 = vunpack.c.l.b16 %v660
        %v741 = vunpack.c.l.b16 %v661
        %v742 = vunpack.c.l.b16 %v662
        %v743 = vunpack.c.l.b16 %v663
        %v744 = vunpack.c.l.b16 %v664
        %v745 = vunpack.c.l.b16 %v665
        %v746 = vunpack.c.l.b16 %v666
        %v747 = vunpack.c.l.b16 %v667
        %v748 = vunpack.c.l.b16 %v668
        %v749 = vunpack.c.l.b16 %v669
        %v750 = vunpack.c.l.b16 %v670
        %v751 = vunpack.c.l.b16 %v671
        %v752 = vunpack.c.l.b16 %v672
        %v753 = vunpack.c.l.b16 %v673
        %v754 = vpack.c.b16 %v739, %v738
        %v755 = vpack.c.b16 %v741, %v740
        %v756 = vpack.c.b16 %v743, %v742
        %v757 = vpack.c.b16 %v745, %v744
        %v758 = vpack.c.b16 %v747, %v746
        %v759 = vpack.c.b16 %v749, %v748
        %v760 = vpack.c.b16 %v751, %v750
        %v761 = vpack.c.b16 %v753, %v752
        %770 = vmatpush.bf16.msra.mxu0 %v761
        %771 = vmatpush.bf16.msra.mxu0 %v760
        %772 = vmatpush.bf16.msra.mxu0 %v759
        %773 = vmatpush.bf16.msra.mxu0 %v758
        %774 = vmatpush.bf16.msra.mxu0 %v757
        %775 = vmatpush.bf16.msra.mxu0 %v756
        %776 = vmatpush.bf16.msra.mxu0 %v755
        %777 = vmatpush.bf16.msra.mxu0 %v754
        %778 = vmatmul.bf16.gmra.mxu0 %v706
        %v779 = vpop.f32.mrf.mxu0
        %v780 = vadd.f32 0.0, %v779
        %v781 = vpop.f32.mrf.mxu0
        %v782 = vadd.f32 0.0, %v781
        %783 = vmatmul.bf16.gmra.mxu0 %v707
        %v784 = vpop.f32.mrf.mxu0
        %v785 = vadd.f32 0.0, %v784
        %v786 = vpop.f32.mrf.mxu0
        %v787 = vadd.f32 0.0, %v786
        %788 = vmatmul.bf16.gmra.mxu0 %v708
        %v789 = vpop.f32.mrf.mxu0
        %v790 = vadd.f32 0.0, %v789
        %v791 = vpop.f32.mrf.mxu0
        %v792 = vadd.f32 0.0, %v791
        %793 = vmatmul.bf16.gmra.mxu0 %v709
        %v794 = vpop.f32.mrf.mxu0
        %v795 = vadd.f32 0.0, %v794
        %v796 = vpop.f32.mrf.mxu0
        %v797 = vadd.f32 0.0, %v796
        %798 = vmatmul.bf16.gmra.mxu0 %v710
        %v799 = vpop.f32.mrf.mxu0
        %v800 = vadd.f32 0.0, %v799
        %v801 = vpop.f32.mrf.mxu0
        %v802 = vadd.f32 0.0, %v801
        %803 = vmatmul.bf16.gmra.mxu0 %v711
        %v804 = vpop.f32.mrf.mxu0
        %v805 = vadd.f32 0.0, %v804
        %v806 = vpop.f32.mrf.mxu0
        %v807 = vadd.f32 0.0, %v806
        %808 = vmatmul.bf16.gmra.mxu0 %v712
        %v809 = vpop.f32.mrf.mxu0
        %v810 = vadd.f32 0.0, %v809
        %v811 = vpop.f32.mrf.mxu0
        %v812 = vadd.f32 0.0, %v811
        %813 = vmatmul.bf16.gmra.mxu0 %v713
        %v814 = vpop.f32.mrf.mxu0
        %v815 = vadd.f32 0.0, %v814
        %v816 = vpop.f32.mrf.mxu0
        %v817 = vadd.f32 0.0, %v816
        %818 = vdwg.mxu0
        %v819 = vld [vmem:[#allocation2] sm:$0xf]
        %v820 = vld [vmem:[#allocation2 + $0x4] sm:$0xf]
        %v821 = vld [vmem:[#allocation2 + $0x8] sm:$0xf]
        %v822 = vld [vmem:[#allocation2 + $0xc] sm:$0xf]
        %v823 = vld [vmem:[#allocation2 + $0x10] sm:$0xf]
        %v824 = vld [vmem:[#allocation2 + $0x14] sm:$0xf]
        %v825 = vld [vmem:[#allocation2 + $0x18] sm:$0xf]
        %v826 = vld [vmem:[#allocation2 + $0x1c] sm:$0xf]
        %v827 = vld [vmem:[#allocation2 + $0x20] sm:$0xf]
        %v828 = vld [vmem:[#allocation2 + $0x24] sm:$0xf]
        %v829 = vld [vmem:[#allocation2 + $0x28] sm:$0xf]
        %v830 = vld [vmem:[#allocation2 + $0x2c] sm:$0xf]
        %v831 = vld [vmem:[#allocation2 + $0x30] sm:$0xf]
        %v832 = vld [vmem:[#allocation2 + $0x34] sm:$0xf]
        %v833 = vld [vmem:[#allocation2 + $0x38] sm:$0xf]
        %v834 = vld [vmem:[#allocation2 + $0x3c] sm:$0xf]
        %v835 = vpack.c.bf16 %v782, %v780
        %v836 = vpack.c.bf16 %v787, %v785
        %v837 = vpack.c.bf16 %v792, %v790
        %v838 = vpack.c.bf16 %v797, %v795
        %v839 = vpack.c.bf16 %v802, %v800
        %v840 = vpack.c.bf16 %v807, %v805
        %v841 = vpack.c.bf16 %v812, %v810
        %v842 = vpack.c.bf16 %v817, %v815
        %v843 = vld [vmem:[%s192] sm:$0x1]
        %v845 = vperm.slane %v843, 0
        %v863 = vunpack.c.l.b16 %v819
        %v864 = vunpack.c.l.b16 %v820
        %v865 = vunpack.c.l.b16 %v821
        %v866 = vunpack.c.l.b16 %v822
        %v867 = vunpack.c.l.b16 %v823
        %v868 = vunpack.c.l.b16 %v824
        %v869 = vunpack.c.l.b16 %v825
        %v870 = vunpack.c.l.b16 %v826
        %v871 = vunpack.c.l.b16 %v827
        %v872 = vunpack.c.l.b16 %v828
        %v873 = vunpack.c.l.b16 %v829
        %v874 = vunpack.c.l.b16 %v830
        %v875 = vunpack.c.l.b16 %v831
        %v876 = vunpack.c.l.b16 %v832
        %v877 = vunpack.c.l.b16 %v833
        %v878 = vunpack.c.l.b16 %v834
        %v879 = vpack.c.b16 %v864, %v863
        %v880 = vpack.c.b16 %v866, %v865
        %v881 = vpack.c.b16 %v868, %v867
        %v882 = vpack.c.b16 %v870, %v869
        %v883 = vpack.c.b16 %v872, %v871
        %v884 = vpack.c.b16 %v874, %v873
        %v885 = vpack.c.b16 %v876, %v875
        %v886 = vpack.c.b16 %v878, %v877
        %895 = vmatpush.bf16.msra.mxu0 %v842
        %896 = vmatpush.bf16.msra.mxu0 %v841
        %897 = vmatpush.bf16.msra.mxu0 %v840
        %898 = vmatpush.bf16.msra.mxu0 %v839
        %899 = vmatpush.bf16.msra.mxu0 %v838
        %900 = vmatpush.bf16.msra.mxu0 %v837
        %901 = vmatpush.bf16.msra.mxu0 %v836
        %902 = vmatpush.bf16.msra.mxu0 %v835
        %903 = vmatmul.bf16.gmra.mxu0 %v879
        %v904 = vpop.f32.mrf.mxu0
        %v905 = vadd.f32 %v845, %v904
        %v906 = vpop.f32.mrf.mxu0
        %v907 = vadd.f32 %v845, %v906
        %908 = vmatmul.bf16.gmra.mxu0 %v880
        %v909 = vpop.f32.mrf.mxu0
        %v910 = vadd.f32 %v845, %v909
        %v911 = vpop.f32.mrf.mxu0
        %v912 = vadd.f32 %v845, %v911
        %913 = vmatmul.bf16.gmra.mxu0 %v881
        %v914 = vpop.f32.mrf.mxu0
        %v915 = vadd.f32 %v845, %v914
        %v916 = vpop.f32.mrf.mxu0
        %v917 = vadd.f32 %v845, %v916
        %918 = vmatmul.bf16.gmra.mxu0 %v882
        %v919 = vpop.f32.mrf.mxu0
        %v920 = vadd.f32 %v845, %v919
        %v921 = vpop.f32.mrf.mxu0
        %v922 = vadd.f32 %v845, %v921
        %923 = vmatmul.bf16.gmra.mxu0 %v883
        %v924 = vpop.f32.mrf.mxu0
        %v925 = vadd.f32 %v845, %v924
        %v926 = vpop.f32.mrf.mxu0
        %v927 = vadd.f32 %v845, %v926
        %928 = vmatmul.bf16.gmra.mxu0 %v884
        %v929 = vpop.f32.mrf.mxu0
        %v930 = vadd.f32 %v845, %v929
        %v931 = vpop.f32.mrf.mxu0
        %v932 = vadd.f32 %v845, %v931
        %933 = vmatmul.bf16.gmra.mxu0 %v885
        %v934 = vpop.f32.mrf.mxu0
        %v935 = vadd.f32 %v845, %v934
        %v936 = vpop.f32.mrf.mxu0
        %v937 = vadd.f32 %v845, %v936
        %938 = vmatmul.bf16.gmra.mxu0 %v886
        %v939 = vpop.f32.mrf.mxu0
        %v940 = vadd.f32 %v845, %v939
        %v941 = vpop.f32.mrf.mxu0
        %v942 = vadd.f32 %v845, %v941
        %943 = vdwg.mxu0
        %v944 = vmax.f32 %v905, 0.0
        %v945 = vmax.f32 %v907, 0.0
        %v946 = vmax.f32 %v910, 0.0
        %v947 = vmax.f32 %v912, 0.0
        %v948 = vmax.f32 %v915, 0.0
        %v949 = vmax.f32 %v917, 0.0
        %v950 = vmax.f32 %v920, 0.0
        %v951 = vmax.f32 %v922, 0.0
        %v952 = vmax.f32 %v925, 0.0
        %v953 = vmax.f32 %v927, 0.0
        %v954 = vmax.f32 %v930, 0.0
        %v955 = vmax.f32 %v932, 0.0
        %v956 = vmax.f32 %v935, 0.0
        %v957 = vmax.f32 %v937, 0.0
        %v958 = vmax.f32 %v940, 0.0
        %v959 = vmax.f32 %v942, 0.0
        %v960 = vpack.c.bf16 %v944, %v944
        %v961 = vpack.c.bf16 %v945, %v945
        %v962 = vpack.c.bf16 %v946, %v946
        %v963 = vpack.c.bf16 %v947, %v947
        %v964 = vpack.c.bf16 %v948, %v948
        %v965 = vpack.c.bf16 %v949, %v949
        %v966 = vpack.c.bf16 %v950, %v950
        %v967 = vpack.c.bf16 %v951, %v951
        %v968 = vpack.c.bf16 %v952, %v952
        %v969 = vpack.c.bf16 %v953, %v953
        %v970 = vpack.c.bf16 %v954, %v954
        %v971 = vpack.c.bf16 %v955, %v955
        %v972 = vpack.c.bf16 %v956, %v956
        %v973 = vpack.c.bf16 %v957, %v957
        %v974 = vpack.c.bf16 %v958, %v958
        %v975 = vpack.c.bf16 %v959, %v959
        %976 = vst [vmem:[#allocation4] sm:$0xf] %v960
        %977 = vst [vmem:[#allocation4 + $0x4] sm:$0xf] %v961
        %978 = vst [vmem:[#allocation4 + $0x8] sm:$0xf] %v962
        %979 = vst [vmem:[#allocation4 + $0xc] sm:$0xf] %v963
        %980 = vst [vmem:[#allocation4 + $0x10] sm:$0xf] %v964
        %981 = vst [vmem:[#allocation4 + $0x14] sm:$0xf] %v965
        %982 = vst [vmem:[#allocation4 + $0x18] sm:$0xf] %v966
        %983 = vst [vmem:[#allocation4 + $0x1c] sm:$0xf] %v967
        %984 = vst [vmem:[#allocation4 + $0x20] sm:$0xf] %v968
        %985 = vst [vmem:[#allocation4 + $0x24] sm:$0xf] %v969
        %986 = vst [vmem:[#allocation4 + $0x28] sm:$0xf] %v970
        %987 = vst [vmem:[#allocation4 + $0x2c] sm:$0xf] %v971
        %988 = vst [vmem:[#allocation4 + $0x30] sm:$0xf] %v972
        %989 = vst [vmem:[#allocation4 + $0x34] sm:$0xf] %v973
        %990 = vst [vmem:[#allocation4 + $0x38] sm:$0xf] %v974
        %991 = vst [vmem:[#allocation4 + $0x3c] sm:$0xf] %v975
        %p992 = scmp.eq.s32.totalorder %s16, 1
        // Predicated region
        $region83: #{gcn_encode.1} parent=81 // pred_check
          %p993 = pneg %p992
        $region84: #{gcn_encode.1} parent=81 // pred_check_branch
          %995 = sbr.rel (%p993) target = $region86
        $region85: #{gcn_encode.1} parent=81 // pred_region
          %996 = vst [vmem:[%s5] sm:$0xf] %v960
          %997 = vst [vmem:[%s5 + $0x4] sm:$0xf] %v961
          %998 = vst [vmem:[%s5 + $0x8] sm:$0xf] %v962
          %999 = vst [vmem:[%s5 + $0xc] sm:$0xf] %v963
          %1000 = vst [vmem:[%s5 + $0x10] sm:$0xf] %v964
          %1001 = vst [vmem:[%s5 + $0x14] sm:$0xf] %v965
          %1002 = vst [vmem:[%s5 + $0x18] sm:$0xf] %v966
          %1003 = vst [vmem:[%s5 + $0x1c] sm:$0xf] %v967
          %1004 = vst [vmem:[%s5 + $0x20] sm:$0xf] %v968
          %1005 = vst [vmem:[%s5 + $0x24] sm:$0xf] %v969
          %1006 = vst [vmem:[%s5 + $0x28] sm:$0xf] %v970
          %1007 = vst [vmem:[%s5 + $0x2c] sm:$0xf] %v971
          %1008 = vst [vmem:[%s5 + $0x30] sm:$0xf] %v972
          %1009 = vst [vmem:[%s5 + $0x34] sm:$0xf] %v973
          %1010 = vst [vmem:[%s5 + $0x38] sm:$0xf] %v974
          %1011 = vst [vmem:[%s5 + $0x3c] sm:$0xf] %v975
        $region86: #{gcn_encode.1} parent=81 // pred_fallthru
          _
      $region82: #{gcn_encode.1} parent=31 // pred_fallthru
        _
      // Predicated region
      $region87: #{gcn_encode.1} parent=31 // pred_check
        %p1012 = pneg %p108
      $region88: #{gcn_encode.1} parent=31 // pred_check_branch
        %1014 = sbr.rel (%p1012) target = $region90
      $region89: #{gcn_encode.1} parent=31 // pred_region
        _
      $region90: #{gcn_encode.1} parent=31 // pred_fallthru
        _
      // Predicated region
      $region91: #{gcn_encode.1} parent=31 // pred_check
        %p1015 = pneg %p108
      $region92: #{gcn_encode.1} parent=31 // pred_check_branch
        %1017 = sbr.rel (%p1015) target = $region94
      $region93: #{gcn_encode.1} parent=31 // pred_region
        _
      $region94: #{gcn_encode.1} parent=31 // pred_fallthru
        _
    $region32: #{gcn_encode.1} parent=5 // pred_fallthru
      _
    %p1018 = scmp.le.s32.totalorder 2, %s11
    // Predicated region
    $region95: #{gcn_encode.1} parent=5 // pred_check
      %p1019 = pneg %p1018
    $region96: #{gcn_encode.1} parent=5 // pred_check_branch
      %1021 = sbr.rel (%p1019) target = $region98
    $region97: #{gcn_encode.1} parent=5 // pred_region
      %s1022 = ssub.s32 %s11, 2
    $region98: #{gcn_encode.1} parent=5 // pred_fallthru
      _
  $region6: #{gcn_encode.1} parent=0 // loop_footer
    %s15 = sadd.s32 1, %s11
  $region7: #{gcn_encode.1} parent=0 // loop_footer_branch
    %10 = sbr.rel target = $region3
  $region8: #{gcn_encode.1} parent=0 // loop_exit
    _
  %1023 = vsyncmov [#allocation5]
  %s1024 = vpop.sfrf %1023
  %p1025 = scmp.eq.s32.totalorder %s1024, 0
  %p1026 = pneg %p1025
  %1028 = shalt.err (%p1026)
  %s1029 = scalar_lea.sflag [#allocation5], 1
  %1030 = vsyncmov %s1029
  %s1031 = vpop.sfrf %1030
  %p1032 = scmp.eq.s32.totalorder %s1031, 0
  %p1033 = pneg %p1032
  %1035 = shalt.err (%p1033)

</llo_original>
